<compile_context>
chip_gen: v5e
topology: v5e:2x2
jax: 0.10.0
libtpu: 0.0.40
codegen_flags: <defaults>
</compile_context>

<pallas_src>
import functools

import jax
import jax.numpy as jnp
from jax.experimental import pallas as pl
from jax.experimental.pallas import tpu as pltpu


def _round_up(x, m):
    return (x + m - 1) // m * m


def _cdiv(a, b):
    return (a + b - 1) // b


def _choose_tiling(B, bt_max):
    """Pick (batch tile, #grid steps) so that (a) tiles are lane-aligned,
    (b) mid/large batches always get >= 4 grid steps (v7x megacore +
    pipelining), and (c) padding stays small (< ~128 lanes per tile)."""
    b_pad128 = _round_up(B, 128)
    if B < 512:
        return b_pad128, 1                      # tiny batch: one small tile
    nb = max(4, _cdiv(b_pad128, bt_max))        # at least 4 steps, cap tile size
    bt = _round_up(_cdiv(B, nb), 128)
    nb = _cdiv(B, bt)                           # drop fully-padded trailing tiles
    return bt, nb


def _trajectory_kernel(scal_ref, ot_ref, x_ref, o_ref, *, b1, b2, approx_recip):
    # runtime scalars (derived from `params`) live in SMEM via scalar prefetch
    c = scal_ref[0]          # (eta_y_ex * eta_y) ** (1 - r * r_ex)
    exp2 = scal_ref[1]       # r_ex * r / (1 - r_ex * r)

    a1 = x_ref[0]            # (S, bt): seq on sublane, batch on lane
    a2 = x_ref[1]            # (S, bt)
    ot = ot_ref[...]         # (S, 1) column: (1 - r*r_ex) * (t_ex + arange(S))

    # u = a1 * (1 - r*r_ex) * t  -- computed once, reused for both exponents
    u = a1 * ot
    u1 = u if b1 == 1.0 else b1 * u

    # b1 / b2 are static module constants (1.0 at init) -> fold at trace time
    b1a1 = a1 if b1 == 1.0 else b1 * a1
    b2a2 = a2 if b2 == 1.0 else b2 * a2

    if approx_recip:
        ratio = b2a2 * pl.reciprocal(b1a1, approx=True)
    else:
        ratio = b2a2 / b1a1

    base = (c + ratio) * jnp.exp(u) - ratio          # EUP exp #1

    # term1 * term2 with the exponentials fused:
    #   (b1*a1*c + b2*a2) * exp(b1*a1*(1-r*r_ex)*t) * base**exp2
    # = (b1*a1*c + b2*a2) * exp(b1*a1*(1-r*r_ex)*t + exp2*log(base))
    o_ref[...] = (b1a1 * c + b2a2) * jnp.exp(u1 + exp2 * jnp.log(base))  # log #2, exp #3


class TrajectoryIDEPallas:
    """JAX/Pallas port of Trajectory_IDE.forward."""

    SEQ = 24  # PyTorch forward broadcasts against a length-24 t vector

    def __init__(self, seq_len):
        assert seq_len == self.SEQ, "forward hard-codes t = arange(t_ex, t_ex + 24)"
        self.seq_len = seq_len
        # deterministic parameter init, mirroring nn.Parameter(torch.tensor(...))
        self.r_ex = 1.0
        self.eta_y_ex = 1.0
        self.b1 = 1.0
        self.b2 = 1.0
        self.t_ex = 1.1
        self.plus = 0.1

    def __call__(self, inputs, params, *, batch_tile=8192, lane_major_io=False,
                 approx_reciprocal=False):
        assert batch_tile % 128 == 0 and batch_tile >= 128
        S = self.seq_len

        # --- scalar-only parameter glue stays in plain JAX ------------------
        r = params[0].astype(jnp.float32)
        eta_y = params[1].astype(jnp.float32) + jnp.float32(self.plus)
        one_minus = 1.0 - r * self.r_ex
        c = (self.eta_y_ex * eta_y) ** one_minus
        exp2 = self.r_ex * r / (1.0 - self.r_ex * r)
        scalars = jnp.stack([c, exp2]).astype(jnp.float32)

        # (1 - r*r_ex) * t as an (S, 1) column; broadcast along lanes in-kernel
        t = jnp.float32(self.t_ex) + jnp.arange(S, dtype=jnp.float32)
        ot_col = (one_minus * t).reshape(S, 1).astype(jnp.float32)

        # --- layout: lane-dense (2, S, B) slab ------------------------------
        if lane_major_io:
            # caller already feeds (2, S, B); both wrapper transposes removed
            C, s, B = inputs.shape
            assert s == S and C == 2
            x = inputs.astype(jnp.float32)
        else:
            B, s, C = inputs.shape
            assert s == S and C == 2
            # cast+transpose fuse into a single XLA pass (pad folds in too)
            x = jnp.transpose(inputs.astype(jnp.float32), (2, 1, 0))  # (2, S, B)

        bt, nb = _choose_tiling(B, batch_tile)
        b_pad = nb * bt
        if b_pad != B:
            # pad with 1.0 so padded lanes stay numerically benign (no div-by-0);
            # NOTE padded lanes may still overflow for extreme (r, t_ex) -- they
            # are sliced off below and never reduced over, so this is harmless.
            x = jnp.pad(x, ((0, 0), (0, 0), (0, b_pad - B)), constant_values=1.0)

        kern = functools.partial(
            _trajectory_kernel,
            b1=float(self.b1), b2=float(self.b2),
            approx_recip=bool(approx_reciprocal),
        )

        out = pl.pallas_call(
            kern,
            out_shape=jax.ShapeDtypeStruct((S, b_pad), jnp.float32),
            grid_spec=pltpu.PrefetchScalarGridSpec(
                num_scalar_prefetch=1,
                grid=(nb,),
                in_specs=[
                    pl.BlockSpec((S, 1), lambda i, scal: (0, 0)),       # ot column
                    pl.BlockSpec((2, S, bt), lambda i, scal: (0, 0, i)),  # a1/a2 slab
                ],
                out_specs=pl.BlockSpec((S, bt), lambda i, scal: (0, i)),
            ),
            compiler_params=pltpu.CompilerParams(
                dimension_semantics=("parallel",),
            ),
        )(scalars, ot_col, x)

        if lane_major_io:
            return out[:, :B], None           # (S, B), lane-dense, no transpose
        # (S, B) -> (B, 1, S), matching x.unsqueeze(1); second return is None
        return jnp.transpose(out[:, :B])[:, None, :], None


def _reference(inputs, params, mod):
    r = params[0].astype(jnp.float32)
    eta_y = params[1].astype(jnp.float32) + mod.plus
    a1 = inputs[:, :, 0].astype(jnp.float32)
    a2 = inputs[:, :, 1].astype(jnp.float32)
    t = mod.t_ex + jnp.arange(24, dtype=jnp.float32)
    one_minus = 1.0 - r * mod.r_ex
    c = (mod.eta_y_ex * eta_y) ** one_minus
    term1 = (mod.b1 * a1 * c + mod.b2 * a2) * jnp.exp(mod.b1 * a1 * one_minus * t)
    ratio = mod.b2 * a2 / (mod.b1 * a1)
    term2 = ((c + ratio) * jnp.exp(a1 * one_minus * t) - ratio) ** (
        mod.r_ex * r / (1.0 - mod.r_ex * r)
    )
    return (term1 * term2)[:, None, :]


if __name__ == "__main__":
    key = jax.random.PRNGKey(0)
    seq_len = 24
    mod = TrajectoryIDEPallas(seq_len)
    # params[0] = r, params[1] = eta_y   (r chosen so that 1 - r*r_ex != 0)
    params = jnp.array([0.5, 1.0], dtype=jnp.float32)

    # small batch (single 128-lane tile) and mid batch (multi-step grid + padding)
    for batch in (2, 600):
        k = jax.random.fold_in(key, batch)
        # positive inputs keep the fractional power / division well-defined
        inputs = jax.random.uniform(
            k, (batch, seq_len, 2), dtype=jnp.float32, minval=0.5, maxval=1.5
        )
        x, _ = mod(inputs, params)
        x = jax.block_until_ready(x)
        ref = _reference(inputs, params, mod)
        assert x.shape == (batch, 1, seq_len)
        assert jnp.allclose(x, ref, rtol=1e-4, atol=1e-4)

    # lane-major I/O path: caller supplies (2, S, B), gets (S, B) back
    k = jax.random.fold_in(key, 7)
    inputs = jax.random.uniform(
        k, (2, seq_len, 2), dtype=jnp.float32, minval=0.5, maxval=1.5
    )
    y, _ = mod(jnp.transpose(inputs, (2, 1, 0)), params, lane_major_io=True)
    y = jax.block_until_ready(y)
    ref = _reference(inputs, params, mod)
    assert jnp.allclose(jnp.transpose(y)[:, None, :], ref, rtol=1e-4, atol=1e-4)

    print("KERNEL_OK")
</pallas_src>

<mosaic_0001>
module attributes {stable_mosaic.version = 11 : i64} {
  func.func @_trajectory_kernel(%arg0: i32, %arg1: memref<2xf32, #tpu.memory_space<smem>>, %arg2: memref<24x1xf32, #tpu.memory_space<vmem>>, %arg3: memref<2x24x128xf32, #tpu.memory_space<vmem>>, %arg4: memref<24x128xf32, #tpu.memory_space<vmem>>) attributes {dimension_semantics = [#tpu.dimension_semantics<parallel>], iteration_bounds = array<i64: 1>, scalar_prefetch = 1 : i64, scratch_operands = 0 : i64, tpu.core_type = #tpu.core_type<tc>, window_params = [{pipeline_mode = #tpu.pipeline_mode<synchronous>, transform_indices = @transform_0, window_bounds = array<i64: 24, 1>}, {transform_indices = @transform_1, window_bounds = array<i64: 2, 24, 128>}, {transform_indices = @transform_2, window_bounds = array<i64: 24, 128>}]} {
    %c0 = arith.constant 0 : index
    %0 = memref.load %arg1[%c0] : memref<2xf32, #tpu.memory_space<smem>>
    %c1 = arith.constant 1 : index
    %1 = memref.load %arg1[%c1] : memref<2xf32, #tpu.memory_space<smem>>
    %c0_0 = arith.constant 0 : index
    %c0_1 = arith.constant 0 : index
    %c0_2 = arith.constant 0 : index
    %2 = vector.load %arg3[%c0_0, %c0_1, %c0_2] : memref<2x24x128xf32, #tpu.memory_space<vmem>>, vector<1x24x128xf32>
    %3 = vector.shape_cast %2 : vector<1x24x128xf32> to vector<24x128xf32>
    %c1_3 = arith.constant 1 : index
    %c0_4 = arith.constant 0 : index
    %c0_5 = arith.constant 0 : index
    %4 = vector.load %arg3[%c1_3, %c0_4, %c0_5] : memref<2x24x128xf32, #tpu.memory_space<vmem>>, vector<1x24x128xf32>
    %5 = vector.shape_cast %4 : vector<1x24x128xf32> to vector<24x128xf32>
    %c0_6 = arith.constant 0 : index
    %c0_7 = arith.constant 0 : index
    %6 = vector.load %arg2[%c0_6, %c0_7] : memref<24x1xf32, #tpu.memory_space<vmem>>, vector<24x1xf32>
    %7 = vector.broadcast %6 : vector<24x1xf32> to vector<24x128xf32>
    %8 = arith.mulf %3, %7 : vector<24x128xf32>
    %9 = arith.divf %5, %3 : vector<24x128xf32>
    %10 = vector.broadcast %0 : f32 to vector<24x128xf32>
    %11 = arith.addf %10, %9 : vector<24x128xf32>
    %12 = math.exp %8 : vector<24x128xf32>
    %13 = arith.mulf %11, %12 : vector<24x128xf32>
    %14 = arith.subf %13, %9 : vector<24x128xf32>
    %15 = vector.broadcast %0 : f32 to vector<24x128xf32>
    %16 = arith.mulf %3, %15 : vector<24x128xf32>
    %17 = arith.addf %16, %5 : vector<24x128xf32>
    %18 = math.log %14 : vector<24x128xf32>
    %19 = vector.broadcast %1 : f32 to vector<24x128xf32>
    %20 = arith.mulf %19, %18 : vector<24x128xf32>
    %21 = arith.addf %8, %20 : vector<24x128xf32>
    %22 = math.exp %21 : vector<24x128xf32>
    %23 = arith.mulf %17, %22 : vector<24x128xf32>
    %c0_8 = arith.constant 0 : index
    %c0_9 = arith.constant 0 : index
    %24 = vector.load %arg4[%c0_8, %c0_9] : memref<24x128xf32, #tpu.memory_space<vmem>>, vector<24x128xf32>
    tpu.vector_store %arg4[%c0_8, %c0_9], %23 {strides = array<i32>} : memref<24x128xf32, #tpu.memory_space<vmem>>, vector<24x128xf32>,
    return
  }
  func.func @transform_0(%arg0: i32, %arg1: memref<2xf32, #tpu.memory_space<smem>>) -> (i32, i32) {
    %c0_i32 = arith.constant 0 : i32
    %c0_i32_0 = arith.constant 0 : i32
    %c0_i32_1 = arith.constant 0 : i32
    return %c0_i32, %c0_i32_0 : i32, i32
  }
  func.func @transform_1(%arg0: i32, %arg1: memref<2xf32, #tpu.memory_space<smem>>) -> (i32, i32, i32) {
    %c0_i32 = arith.constant 0 : i32
    %c0_i32_0 = arith.constant 0 : i32
    %c0_i32_1 = arith.constant 0 : i32
    return %c0_i32, %c0_i32_0, %arg0 : i32, i32, i32
  }
  func.func @transform_2(%arg0: i32, %arg1: memref<2xf32, #tpu.memory_space<smem>>) -> (i32, i32) {
    %c0_i32 = arith.constant 0 : i32
    %c0_i32_0 = arith.constant 0 : i32
    return %c0_i32, %arg0 : i32, i32
  }
}

</mosaic_0001>

<llo_original>
// kernel: tpu_custom_call.1
$region0: #{tpu_custom_call.1}
  #allocation0 [shape = 'u32[]', space=smem, size = 0x4, offset = 0x4, fixed_abs, tag = 'smem constant byte address 0x4 - core index']
  #allocation1 [shape = 'u32[72,128]{1,0:T(1,128)}', space=vmem, size = 0x9000, scoped, tag = 'internal scratch']
  #allocation2 [shape = 's32[1]{0}', space=sflag, size = 0x4, scoped, tag = 'scoped memory for tpu_custom_call.1']
  #allocation3 [shape = 'u8[512]{0}', space=smem, size = 0x200, scoped, tag = 'prefetched SMEM operand 0']
  %s0 = inlined_call_operand.vmem [shape: f32[2], index: 0, kind: input, shape index: {}]
  %s1 = inlined_call_operand.vmem [shape: f32[24,1], index: 1, kind: input, shape index: {}]
  %s2 = inlined_call_operand.hbm [shape: f32[2,24,128], index: 2, kind: input, shape index: {}]
  %s3 = inlined_call_operand.hbm [shape: f32[24,128], index: 3, kind: output, shape index: {}]
  %s4 = sld [smem:[#allocation0]]
  $region22: #{tpu_custom_call.1} parent=0
    _
  %s6 = ssub.s32 1, %s4
  %s7 = scalar_select 0, %s6, %s4
  %s9 = sshll.u32 %s0, 4
  %s10 = int_to_ptr.vmem [resolvable:$true] %s9
  %12 = dma.vmem_to_smem %s10, 16, [#allocation3], [#allocation2]
  %14 = dma.done [#allocation2], 16
  %15 = sfence
  $region1: #{tpu_custom_call.1} parent=0
    #allocation4 [shape = 'u8[24576]{0}', space=vmem, size = 0x6000, scoped, tag = 'input window, operand 2, single buffered']
    #allocation5 [shape = 's32[1]{0}', space=sflag, size = 0x4, scoped, tag = 'scoped memory for tpu_custom_call.1']
    #allocation6 [shape = 's32[1]{0}', space=sflag, size = 0x4, scoped, tag = 'scoped memory for tpu_custom_call.1']
    #allocation7 [shape = 'u8[12288]{0}', space=vmem, size = 0x3000, scoped, tag = 'output window, operand 0, single buffered']
    %16 = vsyncpa [#allocation5], 0
    %17 = vsyncpa [#allocation6], 0
    // Predicated region
    $region2: #{tpu_custom_call.1} parent=1 // pred_check
      _
    $region3: #{tpu_custom_call.1} parent=1 // pred_check_branch
      %19 = sbr.rel (0) target = $region5
    $region4: #{tpu_custom_call.1} parent=1 // pred_region
      _
    $region5: #{tpu_custom_call.1} parent=1 // pred_fallthru
      _
    // Predicated region
    $region6: #{tpu_custom_call.1} parent=1 // pred_check
      _
    $region7: #{tpu_custom_call.1} parent=1 // pred_check_branch
      %21 = sbr.rel (0) target = $region9
    $region8: #{tpu_custom_call.1} parent=1 // pred_region
      %23 = vsyncadd [#allocation5], 0
      %s24 = sshll.u32 %s2, 4
      %s25 = int_to_ptr.hbm [resolvable:$true] %s24
      %s26 = sshll.u32 [#allocation4], 4
      %s27 = int_to_ptr.vmem [resolvable:$true] %s26
      %32 = dma.hbm_to_vmem [thread:$0]  %s25, 768, %s27, [#allocation5], 128, 128, 8
    $region9: #{tpu_custom_call.1} parent=1 // pred_fallthru
      _
    // Predicated region
    $region10: #{tpu_custom_call.1} parent=1 // pred_check
      _
    $region11: #{tpu_custom_call.1} parent=1 // pred_check_branch
      %34 = sbr.rel (0) target = $region13
    $region12: #{tpu_custom_call.1} parent=1 // pred_region
      %36 = dma.done [#allocation5], 768
    $region13: #{tpu_custom_call.1} parent=1 // pred_fallthru
      _
    %s37 = sld [smem:[#allocation3]]
    %s38 = sld [smem:[#allocation3 + $0x1]]
    %v39 = vld [vmem:[#allocation4] sm:$0xff]
    %v40 = vld [vmem:[#allocation4 + $0x8] sm:$0xff]
    %v41 = vld [vmem:[#allocation4 + $0x10] sm:$0xff]
    %s42 = scalar_lea.vmem [#allocation4], 24
    %v43 = vld [vmem:[%s42] sm:$0xff]
    %v44 = vld [vmem:[%s42 + $0x8] sm:$0xff]
    %v45 = vld [vmem:[%s42 + $0x10] sm:$0xff]
    %v46 = vld [vmem:[%s1] sm:$0xff]
    %v47 = vld [vmem:[%s1 + $0x8] sm:$0xff]
    %v48 = vld [vmem:[%s1 + $0x10] sm:$0xff]
    %50 = vset.pattern.permute.xlu0 0
    %51 = vperm.xlu0 %50, %v46
    %v52 = vpop.permute.xlu0 %51
    %55 = vset.pattern.permute.xlu0 0
    %56 = vperm.xlu0 %55, %v47
    %v57 = vpop.permute.xlu0 %56
    %60 = vset.pattern.permute.xlu0 0
    %61 = vperm.xlu0 %60, %v48
    %v62 = vpop.permute.xlu0 %61
    %v64 = vmul.f32 %v39, %v52
    %v65 = vmul.f32 %v40, %v57
    %v66 = vmul.f32 %v41, %v62
    %v67 = vrcp.pop %v39
    %v68 = vmul.f32 %v39, %v67
    %v69 = vsub.f32 1.0, %v68
    %v70 = vmul.f32 %v67, %v69
    %v71 = vadd.f32 %v67, %v70
    %vm72 = vweird.f32 %v39
    %vm73 = vweird.f32 %v67
    %vm74 = vmor %vm72, %vm73
    %v75 = vsel %vm74, %v67, %v71
    %v76 = vand.u32 2147483647, %v39
    %vm77 = vcmp.eq.f32.partialorder %v76, 8.507059e+37
    %v78 = vand.u32 %v39, 2147483648
    %v79 = vor.u32 1.1754944e-38, %v78
    %v80 = vsel %vm77, %v79, %v75
    %v81 = vmul.f32 %v43, %v80
    %v82 = vrcp.pop %v40
    %v83 = vmul.f32 %v40, %v82
    %v84 = vsub.f32 1.0, %v83
    %v85 = vmul.f32 %v82, %v84
    %v86 = vadd.f32 %v82, %v85
    %vm87 = vweird.f32 %v40
    %vm88 = vweird.f32 %v82
    %vm89 = vmor %vm87, %vm88
    %v90 = vsel %vm89, %v82, %v86
    %v91 = vand.u32 2147483647, %v40
    %vm92 = vcmp.eq.f32.partialorder %v91, 8.507059e+37
    %v93 = vand.u32 %v40, 2147483648
    %v94 = vor.u32 1.1754944e-38, %v93
    %v95 = vsel %vm92, %v94, %v90
    %v96 = vmul.f32 %v44, %v95
    %v97 = vrcp.pop %v41
    %v98 = vmul.f32 %v41, %v97
    %v99 = vsub.f32 1.0, %v98
    %v100 = vmul.f32 %v97, %v99
    %v101 = vadd.f32 %v97, %v100
    %vm102 = vweird.f32 %v41
    %vm103 = vweird.f32 %v97
    %vm104 = vmor %vm102, %vm103
    %v105 = vsel %vm104, %v97, %v101
    %v106 = vand.u32 2147483647, %v41
    %vm107 = vcmp.eq.f32.partialorder %v106, 8.507059e+37
    %v108 = vand.u32 %v41, 2147483648
    %v109 = vor.u32 1.1754944e-38, %v108
    %v110 = vsel %vm107, %v109, %v105
    %v111 = vmul.f32 %v45, %v110
    %v112 = vstv %s37
    %v113 = vadd.f32 %v112, %v81
    %v114 = vadd.f32 %v112, %v96
    %v115 = vadd.f32 %v112, %v111
    %v116 = vmul.f32 %v64, 1.442695
    %v117 = vpow.pop %v116
    %v118 = vmul.f32 %v65, 1.442695
    %v119 = vpow.pop %v118
    %v120 = vmul.f32 %v66, 1.442695
    %v121 = vpow.pop %v120
    %v122 = vmul.f32 %v113, %v117
    %v123 = vmul.f32 %v114, %v119
    %v124 = vmul.f32 %v115, %v121
    %v125 = vsub.f32 %v122, %v81
    %v126 = vsub.f32 %v123, %v96
    %v127 = vsub.f32 %v124, %v111
    %v128 = vmul.f32 %v39, %v112
    %v129 = vmul.f32 %v40, %v112
    %v130 = vmul.f32 %v41, %v112
    %v131 = vadd.f32 %v128, %v43
    %v132 = vadd.f32 %v129, %v44
    %v133 = vadd.f32 %v130, %v45
    %v134 = vlog2.pop %v125
    %v135 = vmul.f32 %v134, 0.6931472
    %v136 = vlog2.pop %v126
    %v137 = vmul.f32 %v136, 0.6931472
    %v138 = vlog2.pop %v127
    %v139 = vmul.f32 %v138, 0.6931472
    %v140 = vstv %s38
    %v141 = vmul.f32 %v140, %v135
    %v142 = vmul.f32 %v140, %v137
    %v143 = vmul.f32 %v140, %v139
    %v144 = vadd.f32 %v64, %v141
    %v145 = vadd.f32 %v65, %v142
    %v146 = vadd.f32 %v66, %v143
    %v147 = vmul.f32 %v144, 1.442695
    %v148 = vpow.pop %v147
    %v149 = vmul.f32 %v145, 1.442695
    %v150 = vpow.pop %v149
    %v151 = vmul.f32 %v146, 1.442695
    %v152 = vpow.pop %v151
    %v153 = vmul.f32 %v131, %v148
    %v154 = vmul.f32 %v132, %v150
    %v155 = vmul.f32 %v133, %v152
    %156 = vst [vmem:[#allocation7] sm:$0xff] %v153
    %157 = vst [vmem:[#allocation7 + $0x8] sm:$0xff] %v154
    %158 = vst [vmem:[#allocation7 + $0x10] sm:$0xff] %v155
    // Predicated region
    $region14: #{tpu_custom_call.1} parent=1 // pred_check
      _
    $region15: #{tpu_custom_call.1} parent=1 // pred_check_branch
      %160 = sbr.rel (0) target = $region17
    $region16: #{tpu_custom_call.1} parent=1 // pred_region
      %162 = vsyncadd [#allocation6], 0
      %s163 = sshll.u32 [#allocation7], 4
      %s164 = int_to_ptr.vmem [resolvable:$true] %s163
      %s165 = sshll.u32 %s3, 4
      %s166 = int_to_ptr.hbm [resolvable:$true] %s165
      %171 = dma.vmem_to_hbm [thread:$0]  %s164, 384, %s166, [#allocation6], 128, 128, 8
    $region17: #{tpu_custom_call.1} parent=1 // pred_fallthru
      _
    // Predicated region
    $region18: #{tpu_custom_call.1} parent=1 // pred_check
      _
    $region19: #{tpu_custom_call.1} parent=1 // pred_check_branch
      %173 = sbr.rel (0) target = $region21
    $region20: #{tpu_custom_call.1} parent=1 // pred_region
      %175 = dma.done [#allocation6], 384
    $region21: #{tpu_custom_call.1} parent=1 // pred_fallthru
      _
    %176 = vsyncpa [#allocation5], 1
    %177 = vsyncpa [#allocation6], 1

</llo_original>
